<compile_context>
chip_gen: v5e
topology: v5e:2x2
jax: 0.10.0
libtpu: 0.0.40
codegen_flags: <defaults>
</compile_context>

<pallas_src>
import functools

import jax
import jax.numpy as jnp
import numpy as np
from jax.experimental import pallas as pl
from jax.experimental.pallas import tpu as pltpu

D_PAD = 128            # lane-dense histogram width; sliced to out_dim outside
_EPILOGUE_SLAB = 512   # lane slab for the compare/reduce epilogue

_TP_CANDIDATES = (512, 256, 128, 64, 32, 16, 8)
_TK_CANDIDATES = (512, 256, 128)


def _round_up(x, m):
    return (x + m - 1) // m * m


def _divisor_candidates(cands, total):
    out = [c for c in cands if c <= total and total % c == 0]
    return out or [total]


def _select_compute_dtype():
    """Matmul/accumulate dtypes.  0/1-valued data is exact in all of these."""
    try:
        kind = jax.devices()[0].device_kind.lower()
    except Exception:
        kind = ""
    if "v5" in kind or "v6" in kind:
        # int MXU: halves the dominant adjacency HBM stream + VMEM footprint.
        return jnp.int8, jnp.int32
    # TODO(synk): fp8 e4m3 for v7x (no integer MXU there); bf16 is always safe.
    return jnp.bfloat16, jnp.float32


def _vmem_budget_bytes():
    """VMEM budget for the tile planner (and vmem_limit_bytes)."""
    try:
        phys = int(pltpu.get_tpu_info().vmem_capacity_bytes)
    except Exception:
        phys = 64 * 1024 * 1024          # conservative (v7x-sized) fallback
    # 128 MiB parts (v5e/v6e) -> 96 MiB, 64 MiB parts (v7x) -> 48 MiB.
    return min((phys * 3) // 4, 96 * 1024 * 1024)


# ----------------------------------------------------------------------------
# shared epilogue: masked degree values -> lane-dense histogram
# ----------------------------------------------------------------------------
def _degree_histogram(deg_slab, mem_slab, n_total, out_dim, out_shape):
    """hist[p, d] = #{member nodes n : deg[p, n] == d} for d < out_dim.

    Slab-chunked over the lane (node) axis with the bin loop innermost so each
    [TP, slab] degree slab is loaded once and stays vreg-resident across all
    out_dim compare passes (instead of re-reading the full accumulator per
    bin).  Compares run in int32 (int path) or bf16 (float path).
    """
    lane_id = jax.lax.broadcasted_iota(jnp.int32, (1, out_shape[1]), 1)
    hist = jnp.zeros(out_shape, jnp.float32)
    slab = min(_EPILOGUE_SLAB, n_total)
    for s in range(0, n_total, slab):                      # static unroll
        w = min(slab, n_total - s)
        deg_s = deg_slab(s, w)
        mem_s = mem_slab(s, w)
        if jnp.issubdtype(deg_s.dtype, jnp.integer):
            deg_m = jnp.where(mem_s != 0, deg_s, -1)       # int32 compares
        else:
            # bf16 compares are exact here: integer degrees <= 256 are exactly
            # representable in bf16 and any rounded value >= 256 cannot alias
            # a bin below out_dim <= 128.  -1 marks non-members (never a bin).
            deg_m = jnp.where(mem_s != 0, deg_s, -1.0).astype(jnp.bfloat16)
        for d in range(out_dim):                           # static unroll
            col = jnp.sum((deg_m == d).astype(jnp.float32),
                          axis=1, keepdims=True)           # [TP, 1]
            hist = hist + col * (lane_id == d).astype(jnp.float32)
    return hist


# ----------------------------------------------------------------------------
# kernels
# ----------------------------------------------------------------------------
def _full_degree_hist_kernel(acc_dtype, m_ref, onehot_ref, out_ref):
    """t == 0 : hist = M @ onehot(deg_full).

    One small MXU matmul per P-tile; the N^2 adjacency never enters this
    kernel (deg_full is computed once outside)."""
    out_ref[...] = jnp.dot(m_ref[...], onehot_ref[...],
                           preferred_element_type=acc_dtype
                           ).astype(jnp.float32)


def _induced_hist_resident_kernel(out_dim, acc_dtype, m_ref, a_ref, out_ref):
    """t != 0, adjacency fully VMEM-resident (fetched from HBM exactly once:
    its index_map is constant across the P grid)."""
    deg = jnp.dot(m_ref[...], a_ref[...], preferred_element_type=acc_dtype)
    out_ref[...] = _degree_histogram(
        lambda s, w: deg[:, s:s + w],
        lambda s, w: m_ref[:, s:s + w],
        deg.shape[1], out_dim, out_ref.shape)


def _induced_hist_streamed_kernel(out_dim, tk, m_ref, a_ref, out_ref, deg_acc):
    """t != 0, adjacency streamed in (TK, Np) row blocks over grid axis 1.

    m_ref   : VMEM [TP, Np]   membership rows (single stream, fetched per i)
    a_ref   : VMEM [TK, Np]   adjacency rows k*TK:(k+1)*TK
    out_ref : VMEM [TP, 128]  f32 lane-dense histogram
    deg_acc : VMEM [TP, Np]   f32 / i32 induced-degree accumulator

    The contraction axis is the LAST grid axis ("arbitrary") so the output /
    accumulator block is revisited consecutively.
    """
    k = pl.program_id(1)
    nk = pl.num_programs(1)

    @pl.when(k == 0)
    def _init():
        deg_acc[...] = jnp.zeros_like(deg_acc)

    # Contraction tile sliced out of the single full-row M stream
    # (lane-aligned: tk is a multiple of 128), no second M input needed.
    start = pl.multiple_of(k * tk, tk)
    m_tile = m_ref[:, pl.ds(start, tk)]                    # [TP, TK]
    deg_acc[...] += jnp.dot(m_tile, a_ref[...],
                            preferred_element_type=deg_acc.dtype)

    @pl.when(k == nk - 1)
    def _finalize():
        out_ref[...] = _degree_histogram(
            lambda s, w: deg_acc[:, s:s + w],
            lambda s, w: m_ref[:, s:s + w],
            deg_acc.shape[1], out_dim, out_ref.shape)


# ----------------------------------------------------------------------------
# tile planning + wrappers
# ----------------------------------------------------------------------------
def _plan_induced(p_pad, n_pad, dsize, budget, force_streamed):
    """Pick (variant, tp, tk) within the VMEM budget.

    Working sets (double-buffered input blocks + scratch/intermediate):
      resident : 2*tp*Np*dsize (M) + 2*Np*Np*dsize (A) + tp*Np*4 (deg) + out
      streamed : 2*tp*Np*dsize (M) + 2*tk*Np*dsize (A) + tp*Np*4 (acc)  + out
    Largest TP is preferred first (A traffic in the streamed variant scales
    with p_pad/tp, and it fills the 256-wide MXU rows); the kernel is
    A-bandwidth-bound, so we do not shrink TP for megacore sharding.
    """
    tps = _divisor_candidates(_TP_CANDIDATES, p_pad)
    tks = _divisor_candidates(_TK_CANDIDATES, n_pad)
    out_bytes = lambda tp: 2 * tp * D_PAD * 4
    if not force_streamed:
        for tp in tps:
            need = (2 * tp * n_pad * dsize + 2 * n_pad * n_pad * dsize
                    + tp * n_pad * 4 + out_bytes(tp))
            if need <= budget:
                return "resident", tp, n_pad
    for tp in tps:
        for tk in tks:
            need = (2 * tp * n_pad * dsize + 2 * tk * n_pad * dsize
                    + tp * n_pad * 4 + out_bytes(tp))
            if need <= budget:
                return "streamed", tp, tk
    return "streamed", tps[-1], tks[-1]     # minimal tiles as a last resort


def _hard_embedder_padded(t, membership, adjacency, out_dim, mm_dtype,
                          acc_dtype, force_streamed):
    P, N = membership.shape
    dsize = jnp.dtype(mm_dtype).itemsize
    sublane = {1: 32, 2: 16, 4: 8}[dsize]          # packed sublane granularity

    n_pad = _round_up(max(N, 128), 128)
    p_pad = _round_up(max(P, sublane), sublane)
    budget = _vmem_budget_bytes()

    m_pad = jnp.zeros((p_pad, n_pad), mm_dtype)
    m_pad = m_pad.at[:P, :N].set(membership.astype(mm_dtype))

    if t == 0:
        # --- full-graph degrees: one XLA row-sum + a tiny Pallas matmul -----
        deg_full = jnp.sum(adjacency, axis=1, dtype=jnp.float32).astype(jnp.int32)
        deg_pad = jnp.zeros((n_pad,), jnp.int32).at[:N].set(deg_full)
        # degrees >= 128 produce an all-zero one-hot row -> dropped, matching
        # the Counter semantics (only bins < out_dim are read anyway).
        onehot = (deg_pad[:, None] ==
                  jnp.arange(D_PAD, dtype=jnp.int32)[None, :]).astype(mm_dtype)

        tps = _divisor_candidates(_TP_CANDIDATES, p_pad)
        tp = next((c for c in tps
                   if (2 * c * n_pad * dsize + 2 * n_pad * D_PAD * dsize
                       + 2 * c * D_PAD * 4) <= budget), tps[-1])

        out = pl.pallas_call(
            functools.partial(_full_degree_hist_kernel, acc_dtype),
            out_shape=jax.ShapeDtypeStruct((p_pad, D_PAD), jnp.float32),
            grid_spec=pltpu.PrefetchScalarGridSpec(
                num_scalar_prefetch=0,
                grid=(p_pad // tp,),
                in_specs=[
                    pl.BlockSpec((tp, n_pad), lambda i: (i, 0)),     # M rows
                    pl.BlockSpec((n_pad, D_PAD), lambda i: (0, 0)),  # onehot
                ],
                out_specs=pl.BlockSpec((tp, D_PAD), lambda i: (i, 0)),
            ),
            compiler_params=pltpu.CompilerParams(
                dimension_semantics=("parallel",),
                vmem_limit_bytes=budget),
        )(m_pad, onehot)
        return out[:P, :out_dim]

    # --- t != 0 : induced-subgraph degrees via M @ A on the MXU -------------
    a_pad = jnp.zeros((n_pad, n_pad), mm_dtype)
    a_pad = a_pad.at[:N, :N].set(adjacency.astype(mm_dtype))

    variant, tp, tk = _plan_induced(p_pad, n_pad, dsize, budget, force_streamed)

    if variant == "resident":
        out = pl.pallas_call(
            functools.partial(_induced_hist_resident_kernel, out_dim, acc_dtype),
            out_shape=jax.ShapeDtypeStruct((p_pad, D_PAD), jnp.float32),
            grid_spec=pltpu.PrefetchScalarGridSpec(
                num_scalar_prefetch=0,
                grid=(p_pad // tp,),
                in_specs=[
                    pl.BlockSpec((tp, n_pad), lambda i: (i, 0)),     # M rows
                    pl.BlockSpec((n_pad, n_pad), lambda i: (0, 0)),  # A resident
                ],
                out_specs=pl.BlockSpec((tp, D_PAD), lambda i: (i, 0)),
            ),
            compiler_params=pltpu.CompilerParams(
                dimension_semantics=("parallel",),
                vmem_limit_bytes=budget),
        )(m_pad, a_pad)
    else:
        out = pl.pallas_call(
            functools.partial(_induced_hist_streamed_kernel, out_dim, tk),
            out_shape=jax.ShapeDtypeStruct((p_pad, D_PAD), jnp.float32),
            grid_spec=pltpu.PrefetchScalarGridSpec(
                num_scalar_prefetch=0,
                grid=(p_pad // tp, n_pad // tk),   # contraction axis last
                in_specs=[
                    pl.BlockSpec((tp, n_pad), lambda i, k: (i, 0)),  # M rows
                    pl.BlockSpec((tk, n_pad), lambda i, k: (k, 0)),  # A rows
                ],
                out_specs=pl.BlockSpec((tp, D_PAD), lambda i, k: (i, 0)),
                scratch_shapes=[pltpu.VMEM((tp, n_pad), acc_dtype)],
            ),
            compiler_params=pltpu.CompilerParams(
                dimension_semantics=("parallel", "arbitrary"),
                vmem_limit_bytes=budget),
        )(m_pad, a_pad)
    return out[:P, :out_dim]


def hard_embedder(t, membership, adjacency, out_dim, *, force_streamed=False,
                  compute_dtype=None):
    """membership: [P, N] 0/1 spotlight matrix for coarsening level t.
    adjacency: [N, N] symmetric 0/1, no self-loops.
    Returns [P, out_dim] f32 degree histograms (rows match torch.stack order)."""
    P, N = membership.shape
    assert adjacency.shape == (N, N)
    # out_dim <= 128 also guarantees the bf16 compares in the epilogue are exact.
    assert out_dim <= D_PAD

    if compute_dtype is not None:
        mm_dtype = jnp.dtype(compute_dtype)
        acc_dtype = (jnp.int32 if jnp.issubdtype(mm_dtype, jnp.integer)
                     else jnp.float32)
    else:
        mm_dtype, acc_dtype = _select_compute_dtype()

    try:
        return _hard_embedder_padded(t, membership, adjacency, out_dim,
                                     mm_dtype, acc_dtype, force_streamed)
    except Exception:
        if jnp.dtype(mm_dtype) == jnp.dtype(jnp.bfloat16):
            raise
        # Narrow-dtype MXU path not available on this chip: exact bf16 fallback.
        return _hard_embedder_padded(t, membership, adjacency, out_dim,
                                     jnp.bfloat16, jnp.float32, force_streamed)


def hard_embedder_stacked(memberships, adjacency, out_dim, **kwargs):
    """Batch several coarsening levels / pool sets along P so the adjacency is
    read by the kernel exactly once for all of them.

    NOTE: this always computes INDUCED-subgraph (t != 0) histograms.  Level-0
    memberships must go through hard_embedder(0, ...) instead (full-graph
    degrees); passing them here would silently change the semantics."""
    sizes = [m.shape[0] for m in memberships]
    stacked = jnp.concatenate(list(memberships), axis=0)
    out = hard_embedder(1, stacked, adjacency, out_dim, **kwargs)  # any t != 0
    offs = np.cumsum([0] + sizes)
    return [out[offs[i]:offs[i + 1]] for i in range(len(sizes))]


def _reference(t, spotlight_sets, adj_np, out_dim):
    """Pure-numpy mirror of the networkx/Counter semantics."""
    deg_full = adj_np.sum(axis=1)
    rows = []
    for nodes in spotlight_sets:
        hist = np.zeros(out_dim, dtype=np.float32)
        for n in nodes:
            if t == 0:
                d = int(deg_full[n])
            else:
                d = int(sum(adj_np[n, m] for m in nodes))
            if d < out_dim:
                hist[d] += 1.0
        rows.append(hist)
    return np.stack(rows)


if __name__ == "__main__":
    N, P, E, OUT_DIM = 16, 8, 32, 16

    key = jax.random.PRNGKey(0)
    k_src, k_off, k_m0, k_m2, k_m3 = jax.random.split(key, 5)

    # edge_index_initial: [2, E], no self-loops by construction.
    src = jax.random.randint(k_src, (E,), 0, N)
    dst = (src + jax.random.randint(k_off, (E,), 1, N)) % N
    edge_index = jnp.stack([src, dst]).astype(jnp.int32)

    # Dense symmetric 0/1 adjacency (host-side glue replacing nx.Graph).
    A = jnp.zeros((N, N), jnp.float32)
    A = A.at[src, dst].set(1.0)
    A = A.at[dst, src].set(1.0)

    # spotlights[t]: one node set per pool node, encoded as membership matrices.
    M = {0: (jax.random.uniform(k_m0, (P, N)) < 0.45).astype(jnp.float32),
         2: (jax.random.uniform(k_m2, (P, N)) < 0.45).astype(jnp.float32),
         3: (jax.random.uniform(k_m3, (P, N)) < 0.45).astype(jnp.float32)}

    A_np = np.asarray(A)
    sets = {t: [sorted(np.nonzero(np.asarray(M[t])[p])[0].tolist())
                for p in range(P)] for t in M}

    checks = []

    # t == 0 (hoisted full-degree path) and t == 2 (induced, resident-A path).
    for t in (0, 2):
        out = jax.block_until_ready(hard_embedder(t, M[t], A, OUT_DIM))
        checks.append((f"t={t}", out, _reference(t, sets[t], A_np, OUT_DIM)))

    # Induced path with the contraction-streamed kernel variant forced on.
    out = jax.block_until_ready(
        hard_embedder(2, M[2], A, OUT_DIM, force_streamed=True))
    checks.append(("t=2 streamed", out, _reference(2, sets[2], A_np, OUT_DIM)))

    # bf16 variant exercised explicitly (it is the fallback on int-MXU chips).
    out = jax.block_until_ready(
        hard_embedder(2, M[2], A, OUT_DIM, compute_dtype=jnp.bfloat16))
    checks.append(("t=2 bf16", out, _reference(2, sets[2], A_np, OUT_DIM)))

    # Batched t != 0 levels: adjacency read once for both coarsening levels.
    outs = jax.block_until_ready(hard_embedder_stacked([M[2], M[3]], A, OUT_DIM))
    for t, o in zip((2, 3), outs):
        checks.append((f"stacked t={t}", o, _reference(t, sets[t], A_np, OUT_DIM)))

    ok = True
    for name, got, ref in checks:
        if not np.allclose(np.asarray(got), ref):
            ok = False
            print(f"MISMATCH {name}\nkernel=\n{np.asarray(got)}\nref=\n{ref}")

    if ok:
        print("KERNEL_OK")
</pallas_src>

<mosaic_0001>
module attributes {stable_mosaic.version = 11 : i64} {
  func.func @_full_degree_hist_kernel(%arg0: i32, %arg1: memref<16x128xbf16, #tpu.memory_space<vmem>>, %arg2: memref<128x128xbf16, #tpu.memory_space<vmem>>, %arg3: memref<16x128xf32, #tpu.memory_space<vmem>>) attributes {dimension_semantics = [#tpu.dimension_semantics<parallel>], iteration_bounds = array<i64: 1>, scalar_prefetch = 0 : i64, scratch_operands = 0 : i64, tpu.core_type = #tpu.core_type<tc>, window_params = [{transform_indices = @transform_0, window_bounds = array<i64: 16, 128>}, {pipeline_mode = #tpu.pipeline_mode<synchronous>, transform_indices = @transform_1, window_bounds = array<i64: 128, 128>}, {transform_indices = @transform_2, window_bounds = array<i64: 16, 128>}]} {
    %c0 = arith.constant 0 : index
    %c0_0 = arith.constant 0 : index
    %0 = vector.load %arg1[%c0, %c0_0] : memref<16x128xbf16, #tpu.memory_space<vmem>>, vector<16x128xbf16>
    %c0_1 = arith.constant 0 : index
    %c0_2 = arith.constant 0 : index
    %1 = vector.load %arg2[%c0_1, %c0_2] : memref<128x128xbf16, #tpu.memory_space<vmem>>, vector<128x128xbf16>
    %cst = arith.constant dense<0.000000e+00> : vector<16x128xf32>
    %2 = tpu.matmul %0, %1, %cst {dimension_numbers = #tpu.dot_dimension_numbers<[1], [0], [0], [1], [0, 0, 1, 1], [], []>} : vector<16x128xbf16>, vector<128x128xbf16>, vector<16x128xf32> -> vector<16x128xf32>
    %c0_3 = arith.constant 0 : index
    %c0_4 = arith.constant 0 : index
    %3 = vector.load %arg3[%c0_3, %c0_4] : memref<16x128xf32, #tpu.memory_space<vmem>>, vector<16x128xf32>
    tpu.vector_store %arg3[%c0_3, %c0_4], %2 {strides = array<i32>} : memref<16x128xf32, #tpu.memory_space<vmem>>, vector<16x128xf32>,
    return
  }
  func.func @transform_0(%arg0: i32) -> (i32, i32) {
    %c0_i32 = arith.constant 0 : i32
    %c0_i32_0 = arith.constant 0 : i32
    return %arg0, %c0_i32 : i32, i32
  }
  func.func @transform_1(%arg0: i32) -> (i32, i32) {
    %c0_i32 = arith.constant 0 : i32
    %c0_i32_0 = arith.constant 0 : i32
    %c0_i32_1 = arith.constant 0 : i32
    return %c0_i32, %c0_i32_0 : i32, i32
  }
  func.func @transform_2(%arg0: i32) -> (i32, i32) {
    %c0_i32 = arith.constant 0 : i32
    %c0_i32_0 = arith.constant 0 : i32
    return %arg0, %c0_i32 : i32, i32
  }
}

</mosaic_0001>

<llo_original>
// kernel: tpu_custom_call.1
$region0: #{tpu_custom_call.1}
  #allocation0 [shape = 'u32[]', space=smem, size = 0x4, offset = 0x4, fixed_abs, tag = 'smem constant byte address 0x4 - core index']
  #allocation1 [shape = 'u32[72,128]{1,0:T(1,128)}', space=vmem, size = 0x9000, scoped, tag = 'internal scratch']
  %s0 = inlined_call_operand.hbm [shape: bf16[16,128], index: 0, kind: input, shape index: {}]
  %s1 = inlined_call_operand.hbm [shape: bf16[128,128], index: 1, kind: input, shape index: {}]
  %s2 = inlined_call_operand.hbm [shape: f32[16,128], index: 2, kind: output, shape index: {}]
  %s3 = sld [smem:[#allocation0]]
  $region26: #{tpu_custom_call.1} parent=0
    _
  %s5 = ssub.s32 1, %s3
  %s6 = scalar_select 0, %s5, %s3
  $region1: #{tpu_custom_call.1} parent=0
    #allocation2 [shape = 'u8[4096]{0}', space=vmem, size = 0x1000, scoped, tag = 'input window, operand 0, single buffered']
    #allocation3 [shape = 's32[1]{0}', space=sflag, size = 0x4, scoped, tag = 'scoped memory for tpu_custom_call.1']
    #allocation4 [shape = 's32[1]{0}', space=sflag, size = 0x4, scoped, tag = 'scoped memory for tpu_custom_call.1']
    #allocation5 [shape = 'u8[32768]{0}', space=vmem, size = 0x8000, scoped, tag = 'input window, operand 1, single buffered']
    #allocation6 [shape = 's32[1]{0}', space=sflag, size = 0x4, scoped, tag = 'scoped memory for tpu_custom_call.1']
    #allocation7 [shape = 'u8[8192]{0}', space=vmem, size = 0x2000, scoped, tag = 'output window, operand 0, single buffered']
    %7 = vsyncpa [#allocation3], 0
    %8 = vsyncpa [#allocation6], 0
    %9 = vsyncpa [#allocation4], 0
    // Predicated region
    $region2: #{tpu_custom_call.1} parent=1 // pred_check
      _
    $region3: #{tpu_custom_call.1} parent=1 // pred_check_branch
      %11 = sbr.rel (0) target = $region5
    $region4: #{tpu_custom_call.1} parent=1 // pred_region
      %13 = vsyncadd [#allocation3], 0
      %s14 = sshll.u32 %s0, 4
      %s15 = int_to_ptr.hbm [resolvable:$true] %s14
      %s16 = sshll.u32 [#allocation2], 4
      %s17 = int_to_ptr.vmem [resolvable:$true] %s16
      %22 = dma.hbm_to_vmem [thread:$0]  %s15, 128, %s17, [#allocation3], 64, 64, 4
    $region5: #{tpu_custom_call.1} parent=1 // pred_fallthru
      _
    // Predicated region
    $region6: #{tpu_custom_call.1} parent=1 // pred_check
      _
    $region7: #{tpu_custom_call.1} parent=1 // pred_check_branch
      %24 = sbr.rel (0) target = $region9
    $region8: #{tpu_custom_call.1} parent=1 // pred_region
      %26 = vsyncadd [#allocation6], 0
      %s27 = sshll.u32 %s1, 4
      %s28 = int_to_ptr.hbm [resolvable:$true] %s27
      %s29 = sshll.u32 [#allocation5], 4
      %s30 = int_to_ptr.vmem [resolvable:$true] %s29
      %35 = dma.hbm_to_vmem [thread:$0]  %s28, 1024, %s30, [#allocation6], 64, 64, 4
    $region9: #{tpu_custom_call.1} parent=1 // pred_fallthru
      _
    // Predicated region
    $region10: #{tpu_custom_call.1} parent=1 // pred_check
      _
    $region11: #{tpu_custom_call.1} parent=1 // pred_check_branch
      %37 = sbr.rel (0) target = $region13
    $region12: #{tpu_custom_call.1} parent=1 // pred_region
      %39 = dma.done [#allocation3], 128
    $region13: #{tpu_custom_call.1} parent=1 // pred_fallthru
      _
    // Predicated region
    $region14: #{tpu_custom_call.1} parent=1 // pred_check
      _
    $region15: #{tpu_custom_call.1} parent=1 // pred_check_branch
      %41 = sbr.rel (0) target = $region17
    $region16: #{tpu_custom_call.1} parent=1 // pred_region
      %43 = dma.done [#allocation6], 1024
    $region17: #{tpu_custom_call.1} parent=1 // pred_fallthru
      _
    %v44 = vld [vmem:[#allocation2] sm:$0xf]
    %v45 = vld [vmem:[#allocation2 + $0x4] sm:$0xf]
    %v46 = vld [vmem:[#allocation5] sm:$0xf]
    %v47 = vld [vmem:[#allocation5 + $0x4] sm:$0xf]
    %v48 = vld [vmem:[#allocation5 + $0x8] sm:$0xf]
    %v49 = vld [vmem:[#allocation5 + $0xc] sm:$0xf]
    %v50 = vld [vmem:[#allocation5 + $0x10] sm:$0xf]
    %v51 = vld [vmem:[#allocation5 + $0x14] sm:$0xf]
    %v52 = vld [vmem:[#allocation5 + $0x18] sm:$0xf]
    %v53 = vld [vmem:[#allocation5 + $0x1c] sm:$0xf]
    %v54 = vld [vmem:[#allocation5 + $0x20] sm:$0xf]
    %v55 = vld [vmem:[#allocation5 + $0x24] sm:$0xf]
    %v56 = vld [vmem:[#allocation5 + $0x28] sm:$0xf]
    %v57 = vld [vmem:[#allocation5 + $0x2c] sm:$0xf]
    %v58 = vld [vmem:[#allocation5 + $0x30] sm:$0xf]
    %v59 = vld [vmem:[#allocation5 + $0x34] sm:$0xf]
    %v60 = vld [vmem:[#allocation5 + $0x38] sm:$0xf]
    %v61 = vld [vmem:[#allocation5 + $0x3c] sm:$0xf]
    %v64 = vunpack.c.l.b16 %v44
    %v65 = vunpack.c.l.b16 %v45
    %v66 = vpack.c.b16 %v65, %v64
    %v84 = vunpack.c.l.b16 %v46
    %v85 = vunpack.c.l.b16 %v47
    %v86 = vunpack.c.l.b16 %v48
    %v87 = vunpack.c.l.b16 %v49
    %v88 = vunpack.c.l.b16 %v50
    %v89 = vunpack.c.l.b16 %v51
    %v90 = vunpack.c.l.b16 %v52
    %v91 = vunpack.c.l.b16 %v53
    %v92 = vunpack.c.l.b16 %v54
    %v93 = vunpack.c.l.b16 %v55
    %v94 = vunpack.c.l.b16 %v56
    %v95 = vunpack.c.l.b16 %v57
    %v96 = vunpack.c.l.b16 %v58
    %v97 = vunpack.c.l.b16 %v59
    %v98 = vunpack.c.l.b16 %v60
    %v99 = vunpack.c.l.b16 %v61
    %v100 = vpack.c.b16 %v85, %v84
    %v101 = vpack.c.b16 %v87, %v86
    %v102 = vpack.c.b16 %v89, %v88
    %v103 = vpack.c.b16 %v91, %v90
    %v104 = vpack.c.b16 %v93, %v92
    %v105 = vpack.c.b16 %v95, %v94
    %v106 = vpack.c.b16 %v97, %v96
    %v107 = vpack.c.b16 %v99, %v98
    %116 = vmatpush.bf16.msra.mxu0 %v107
    %117 = vmatpush.bf16.msra.mxu0 %v106
    %118 = vmatpush.bf16.msra.mxu0 %v105
    %119 = vmatpush.bf16.msra.mxu0 %v104
    %120 = vmatpush.bf16.msra.mxu0 %v103
    %121 = vmatpush.bf16.msra.mxu0 %v102
    %122 = vmatpush.bf16.msra.mxu0 %v101
    %123 = vmatpush.bf16.msra.mxu0 %v100
    %124 = vmatmul.bf16.gmra.mxu0 %v66
    %v125 = vpop.f32.mrf.mxu0
    %v126 = vadd.f32 0.0, %v125
    %v127 = vpop.f32.mrf.mxu0
    %v128 = vadd.f32 0.0, %v127
    %129 = vdwg.mxu0
    %130 = vst [vmem:[#allocation7] sm:$0xff] %v126
    %131 = vst [vmem:[#allocation7 + $0x8] sm:$0xff] %v128
    // Predicated region
    $region18: #{tpu_custom_call.1} parent=1 // pred_check
      _
    $region19: #{tpu_custom_call.1} parent=1 // pred_check_branch
      %133 = sbr.rel (0) target = $region21
    $region20: #{tpu_custom_call.1} parent=1 // pred_region
      %135 = vsyncadd [#allocation4], 0
      %s136 = sshll.u32 [#allocation7], 4
      %s137 = int_to_ptr.vmem [resolvable:$true] %s136
      %s138 = sshll.u32 %s2, 4
      %s139 = int_to_ptr.hbm [resolvable:$true] %s138
      %144 = dma.vmem_to_hbm [thread:$0]  %s137, 256, %s139, [#allocation4], 128, 128, 8
    $region21: #{tpu_custom_call.1} parent=1 // pred_fallthru
      _
    // Predicated region
    $region22: #{tpu_custom_call.1} parent=1 // pred_check
      _
    $region23: #{tpu_custom_call.1} parent=1 // pred_check_branch
      %146 = sbr.rel (0) target = $region25
    $region24: #{tpu_custom_call.1} parent=1 // pred_region
      %148 = dma.done [#allocation4], 256
    $region25: #{tpu_custom_call.1} parent=1 // pred_fallthru
      _
    %149 = vsyncpa [#allocation3], 1
    %150 = vsyncpa [#allocation6], 1
    %151 = vsyncpa [#allocation4], 1

</llo_original>
